<compile_context>
chip_gen: v5e
topology: v5e:2x2
jax: 0.10.0
libtpu: 0.0.40
codegen_flags: <defaults>
</compile_context>

<pallas_src>
import functools

import jax
import jax.numpy as jnp
from jax.experimental import pallas as pl
from jax.experimental.pallas import tpu as pltpu

HIDDEN = 100       # logical hidden size (PyTorch module)
HIDDEN_PAD = 128   # lane-dense padded hidden size


def net_kernel(x_ref, w1_ref, b1_ref, w2_ref, b2_ref, o_ref):
    # fc1: cast the (block_b, S) activation tile to bf16 in-kernel (hidden
    # under the matmul), MXU matmul with f32 accumulation, bias+ReLU in f32.
    x = x_ref[...].astype(jnp.bfloat16)
    h = jnp.dot(x, w1_ref[...], preferred_element_type=jnp.float32)
    h = jnp.maximum(h + b1_ref[...], 0.0)
    # fc2: bf16 activations on the MXU, f32 accumulation, f32 bias.
    out = jnp.dot(h.astype(jnp.bfloat16), w2_ref[...],
                  preferred_element_type=jnp.float32) + b2_ref[...]
    o_ref[...] = out.astype(o_ref.dtype)


def pack_params(w1, b1, w2, b2):
    """Pad the hidden dim to 128 lanes (zero-filled => exact) and cast the
    weight matrices to bf16 once, outside the per-call hot path.

    w1: (num_state, 100), b1: (100,), w2: (100, num_action), b2: (num_action,)
    """
    S, H = w1.shape
    A = w2.shape[1]
    assert H == HIDDEN
    w1_p = jnp.zeros((S, HIDDEN_PAD), jnp.bfloat16).at[:, :H].set(
        w1.astype(jnp.bfloat16))
    b1_p = jnp.zeros((1, HIDDEN_PAD), jnp.float32).at[:, :H].set(
        b1.astype(jnp.float32))
    # Padded hidden rows are zero => they contribute nothing to fc2.
    w2_p = jnp.zeros((HIDDEN_PAD, A), jnp.bfloat16).at[:H, :].set(
        w2.astype(jnp.bfloat16))
    b2_p = b2.astype(jnp.float32).reshape(1, A)
    return w1_p, b1_p, w2_p, b2_p


def _choose_tiling(B, block_cap):
    """Pick (block_b, n_blocks). Single block whenever B fits under the cap;
    otherwise an even number of >=8-row blocks (balanced v7x megacore split)."""
    if B <= block_cap:
        return B, 1
    n_blocks = pl.cdiv(B, block_cap)
    if n_blocks % 2:                      # keep the two-TC split balanced
        n_blocks += 1
    block_b = ((pl.cdiv(B, n_blocks) + 7) // 8) * 8   # rows/block, multiple of 8
    n_blocks = pl.cdiv(B, block_b)
    return block_b, n_blocks


@functools.partial(jax.jit, static_argnames=("block_cap",))
def net_forward(x, w1_p, b1_p, w2_p, b2_p, *, block_cap=1024):
    """x: (B, num_state) f32. Packed params from pack_params().
    Returns (B, num_action) f32."""
    B, S = x.shape
    Hp = w1_p.shape[1]
    A = w2_p.shape[1]

    block_b, n_blocks = _choose_tiling(B, block_cap)

    flops = 2 * B * S * Hp + 2 * B * Hp * A
    bytes_accessed = (x.size * 4 + w1_p.size * 2 + w2_p.size * 2
                      + b1_p.size * 4 + b2_p.size * 4 + B * A * 4)

    out = pl.pallas_call(
        net_kernel,
        out_shape=jax.ShapeDtypeStruct((B, A), jnp.float32),
        grid=(n_blocks,),
        in_specs=[
            # batch tile of activations, pipelined along the grid
            pl.BlockSpec((block_b, S), lambda i: (i, 0)),
            # weights / biases stay VMEM-resident across all grid steps
            pl.BlockSpec((S, Hp), lambda i: (0, 0)),
            pl.BlockSpec((1, Hp), lambda i: (0, 0)),
            pl.BlockSpec((Hp, A), lambda i: (0, 0)),
            pl.BlockSpec((1, A), lambda i: (0, 0)),
        ],
        out_specs=pl.BlockSpec((block_b, A), lambda i: (i, 0)),
        compiler_params=pltpu.CompilerParams(
            dimension_semantics=("parallel",),      # megacore sharding on v7x
            vmem_limit_bytes=16 * 1024 * 1024,      # <2 MiB actually needed
        ),
        cost_estimate=pl.CostEstimate(
            flops=flops, transcendentals=0, bytes_accessed=bytes_accessed),
    )(x, w1_p, b1_p, w2_p, b2_p)

    return out


def init_params(key, num_state, num_action, hidden=HIDDEN):
    # PyTorch Linear default init: U(-1/sqrt(fan_in), 1/sqrt(fan_in)),
    # stored pre-transposed as (in, out) so the kernel computes x @ W + b.
    k1, k2, k3, k4 = jax.random.split(key, 4)
    bound1 = 1.0 / jnp.sqrt(num_state)
    bound2 = 1.0 / jnp.sqrt(hidden)
    w1 = jax.random.uniform(k1, (num_state, hidden), jnp.float32, -bound1, bound1)
    b1 = jax.random.uniform(k2, (hidden,), jnp.float32, -bound1, bound1)
    w2 = jax.random.uniform(k3, (hidden, num_action), jnp.float32, -bound2, bound2)
    b2 = jax.random.uniform(k4, (num_action,), jnp.float32, -bound2, bound2)
    return w1, b1, w2, b2


def reference(x, w1, b1, w2, b2):
    return jnp.maximum(x @ w1 + b1, 0.0) @ w2 + b2


if __name__ == "__main__":
    num_state, num_action = 4, 2  # CartPole-like DQN sizes
    key = jax.random.PRNGKey(0)
    kx, kp, kb = jax.random.split(key, 3)

    w1, b1, w2, b2 = init_params(kp, num_state, num_action)
    packed = pack_params(w1, b1, w2, b2)

    # Small act()-style batch: single grid step, block_b == B.
    batch = 2
    x = jax.random.normal(kx, (batch, num_state), jnp.float32)
    out = net_forward(x, *packed)
    jax.block_until_ready(out)
    ref = reference(x, w1, b1, w2, b2)
    assert out.shape == (batch, num_action)
    assert jnp.allclose(out, ref, atol=5e-2, rtol=5e-2), \
        "mismatch vs reference (small batch)"

    # Replay-minibatch-style batch: default cap -> single step (no padding).
    big_batch = 300
    xb = jax.random.normal(kb, (big_batch, num_state), jnp.float32)
    out_b = net_forward(xb, *packed)
    jax.block_until_ready(out_b)
    ref_b = reference(xb, w1, b1, w2, b2)
    assert out_b.shape == (big_batch, num_action)
    assert jnp.allclose(out_b, ref_b, atol=5e-2, rtol=5e-2), \
        "mismatch vs reference (big batch)"

    # Force the multi-block path (even block count, ragged masked last block).
    out_mb = net_forward(xb, *packed, block_cap=128)
    jax.block_until_ready(out_mb)
    assert out_mb.shape == (big_batch, num_action)
    assert jnp.allclose(out_mb, ref_b, atol=5e-2, rtol=5e-2), \
        "mismatch vs reference (multi-block)"

    print("KERNEL_OK")
</pallas_src>

<mosaic_0001>
module attributes {stable_mosaic.version = 11 : i64} {
  func.func @net_kernel(%arg0: i32, %arg1: memref<2x4xf32, #tpu.memory_space<vmem>>, %arg2: memref<4x128xbf16, #tpu.memory_space<vmem>>, %arg3: memref<1x128xf32, #tpu.memory_space<vmem>>, %arg4: memref<128x2xbf16, #tpu.memory_space<vmem>>, %arg5: memref<1x2xf32, #tpu.memory_space<vmem>>, %arg6: memref<2x2xf32, #tpu.memory_space<vmem>>) attributes {dimension_semantics = [#tpu.dimension_semantics<parallel>], iteration_bounds = array<i64: 1>, scalar_prefetch = 0 : i64, scratch_operands = 0 : i64, tpu.core_type = #tpu.core_type<tc>, window_params = [{transform_indices = @transform_0, window_bounds = array<i64: 2, 4>}, {pipeline_mode = #tpu.pipeline_mode<synchronous>, transform_indices = @transform_1, window_bounds = array<i64: 4, 128>}, {pipeline_mode = #tpu.pipeline_mode<synchronous>, transform_indices = @transform_2, window_bounds = array<i64: 1, 128>}, {pipeline_mode = #tpu.pipeline_mode<synchronous>, transform_indices = @transform_3, window_bounds = array<i64: 128, 2>}, {pipeline_mode = #tpu.pipeline_mode<synchronous>, transform_indices = @transform_4, window_bounds = array<i64: 1, 2>}, {transform_indices = @transform_5, window_bounds = array<i64: 2, 2>}]} {
    %c0 = arith.constant 0 : index
    %c0_0 = arith.constant 0 : index
    %0 = vector.load %arg1[%c0, %c0_0] : memref<2x4xf32, #tpu.memory_space<vmem>>, vector<2x4xf32>
    %1 = arith.truncf %0 : vector<2x4xf32> to vector<2x4xbf16>
    %c0_1 = arith.constant 0 : index
    %c0_2 = arith.constant 0 : index
    %2 = vector.load %arg2[%c0_1, %c0_2] : memref<4x128xbf16, #tpu.memory_space<vmem>>, vector<4x128xbf16>
    %cst = arith.constant dense<0.000000e+00> : vector<2x128xf32>
    %3 = tpu.matmul %1, %2, %cst {dimension_numbers = #tpu.dot_dimension_numbers<[1], [0], [0], [1], [0, 0, 1, 1], [], []>} : vector<2x4xbf16>, vector<4x128xbf16>, vector<2x128xf32> -> vector<2x128xf32>
    %c0_3 = arith.constant 0 : index
    %c0_4 = arith.constant 0 : index
    %4 = vector.load %arg3[%c0_3, %c0_4] : memref<1x128xf32, #tpu.memory_space<vmem>>, vector<1x128xf32>
    %5 = vector.broadcast %4 : vector<1x128xf32> to vector<2x128xf32>
    %6 = arith.addf %3, %5 : vector<2x128xf32>
    %cst_5 = arith.constant 0.000000e+00 : f32
    %7 = vector.broadcast %cst_5 : f32 to vector<2x128xf32>
    %8 = arith.maximumf %6, %7 : vector<2x128xf32>
    %9 = arith.truncf %8 : vector<2x128xf32> to vector<2x128xbf16>
    %c0_6 = arith.constant 0 : index
    %c0_7 = arith.constant 0 : index
    %10 = vector.load %arg4[%c0_6, %c0_7] : memref<128x2xbf16, #tpu.memory_space<vmem>>, vector<128x2xbf16>
    %cst_8 = arith.constant dense<0.000000e+00> : vector<2x2xf32>
    %11 = tpu.matmul %9, %10, %cst_8 {dimension_numbers = #tpu.dot_dimension_numbers<[1], [0], [0], [1], [0, 0, 1, 1], [], []>} : vector<2x128xbf16>, vector<128x2xbf16>, vector<2x2xf32> -> vector<2x2xf32>
    %c0_9 = arith.constant 0 : index
    %c0_10 = arith.constant 0 : index
    %12 = vector.load %arg5[%c0_9, %c0_10] : memref<1x2xf32, #tpu.memory_space<vmem>>, vector<1x2xf32>
    %13 = vector.broadcast %12 : vector<1x2xf32> to vector<2x2xf32>
    %14 = arith.addf %11, %13 : vector<2x2xf32>
    %c0_11 = arith.constant 0 : index
    %c0_12 = arith.constant 0 : index
    %15 = vector.load %arg6[%c0_11, %c0_12] : memref<2x2xf32, #tpu.memory_space<vmem>>, vector<2x2xf32>
    tpu.vector_store %arg6[%c0_11, %c0_12], %14 {strides = array<i32>} : memref<2x2xf32, #tpu.memory_space<vmem>>, vector<2x2xf32>,
    return
  }
  func.func @transform_0(%arg0: i32) -> (i32, i32) {
    %c0_i32 = arith.constant 0 : i32
    %c0_i32_0 = arith.constant 0 : i32
    return %arg0, %c0_i32 : i32, i32
  }
  func.func @transform_1(%arg0: i32) -> (i32, i32) {
    %c0_i32 = arith.constant 0 : i32
    %c0_i32_0 = arith.constant 0 : i32
    %c0_i32_1 = arith.constant 0 : i32
    return %c0_i32, %c0_i32_0 : i32, i32
  }
  func.func @transform_2(%arg0: i32) -> (i32, i32) {
    %c0_i32 = arith.constant 0 : i32
    %c0_i32_0 = arith.constant 0 : i32
    %c0_i32_1 = arith.constant 0 : i32
    return %c0_i32, %c0_i32_0 : i32, i32
  }
  func.func @transform_3(%arg0: i32) -> (i32, i32) {
    %c0_i32 = arith.constant 0 : i32
    %c0_i32_0 = arith.constant 0 : i32
    %c0_i32_1 = arith.constant 0 : i32
    return %c0_i32, %c0_i32_0 : i32, i32
  }
  func.func @transform_4(%arg0: i32) -> (i32, i32) {
    %c0_i32 = arith.constant 0 : i32
    %c0_i32_0 = arith.constant 0 : i32
    %c0_i32_1 = arith.constant 0 : i32
    return %c0_i32, %c0_i32_0 : i32, i32
  }
  func.func @transform_5(%arg0: i32) -> (i32, i32) {
    %c0_i32 = arith.constant 0 : i32
    %c0_i32_0 = arith.constant 0 : i32
    return %arg0, %c0_i32 : i32, i32
  }
}

</mosaic_0001>

<llo_original>
// kernel: net_forward.1
$region0: #{net_forward.1}
  #allocation0 [shape = 'u32[]', space=smem, size = 0x4, offset = 0x4, fixed_abs, tag = 'smem constant byte address 0x4 - core index']
  #allocation1 [shape = 'u32[72,128]{1,0:T(1,128)}', space=vmem, size = 0x9000, scoped, tag = 'internal scratch']
  %s0 = inlined_call_operand.vmem [shape: f32[2,4], index: 0, kind: input, shape index: {}]
  %s1 = inlined_call_operand.vmem [shape: bf16[4,128], index: 1, kind: input, shape index: {}]
  %s2 = inlined_call_operand.vmem [shape: f32[1,128], index: 2, kind: input, shape index: {}]
  %s3 = inlined_call_operand.vmem [shape: bf16[128,2], index: 3, kind: input, shape index: {}]
  %s4 = inlined_call_operand.vmem [shape: f32[1,2], index: 4, kind: input, shape index: {}]
  %s5 = inlined_call_operand.hbm [shape: f32[2,2], index: 5, kind: output, shape index: {}]
  %s6 = sld [smem:[#allocation0]]
  $region30: #{net_forward.1} parent=0
    _
  %s8 = ssub.s32 1, %s6
  %s9 = scalar_select 0, %s8, %s6
  $region1: #{net_forward.1} parent=0
    #allocation2 [shape = 'u8[1024]{0}', space=vmem, size = 0x400, scoped, tag = 'output window, operand 0, single buffered']
    #allocation3 [shape = 's32[1]{0}', space=sflag, size = 0x4, scoped, tag = 'scoped memory for net_forward.1']
    %10 = vsyncpa [#allocation3], 0
    // Predicated region
    $region2: #{net_forward.1} parent=1 // pred_check
      _
    $region3: #{net_forward.1} parent=1 // pred_check_branch
      %12 = sbr.rel (0) target = $region5
    $region4: #{net_forward.1} parent=1 // pred_region
      _
    $region5: #{net_forward.1} parent=1 // pred_fallthru
      _
    // Predicated region
    $region6: #{net_forward.1} parent=1 // pred_check
      _
    $region7: #{net_forward.1} parent=1 // pred_check_branch
      %14 = sbr.rel (0) target = $region9
    $region8: #{net_forward.1} parent=1 // pred_region
      _
    $region9: #{net_forward.1} parent=1 // pred_fallthru
      _
    // Predicated region
    $region10: #{net_forward.1} parent=1 // pred_check
      _
    $region11: #{net_forward.1} parent=1 // pred_check_branch
      %16 = sbr.rel (0) target = $region13
    $region12: #{net_forward.1} parent=1 // pred_region
      _
    $region13: #{net_forward.1} parent=1 // pred_fallthru
      _
    // Predicated region
    $region14: #{net_forward.1} parent=1 // pred_check
      _
    $region15: #{net_forward.1} parent=1 // pred_check_branch
      %18 = sbr.rel (0) target = $region17
    $region16: #{net_forward.1} parent=1 // pred_region
      _
    $region17: #{net_forward.1} parent=1 // pred_fallthru
      _
    // Predicated region
    $region18: #{net_forward.1} parent=1 // pred_check
      _
    $region19: #{net_forward.1} parent=1 // pred_check_branch
      %20 = sbr.rel (0) target = $region21
    $region20: #{net_forward.1} parent=1 // pred_region
      _
    $region21: #{net_forward.1} parent=1 // pred_fallthru
      _
    %v22 = vld [vmem:[%s0] sm:$0x3]
    %v23 = vpack.c.bf16 %v22, %v22
    %v24 = vld [vmem:[%s1] sm:$0x3]
    %v25 = vld [vmem:[%s2] sm:$0x1]
    %v27 = vperm.slane %v25, 0
    %vm29 = vcmask 31744
    %v31 = vsel %vm29, %v23, 0
    %vm33 = vcmask 1041408
    %v35 = vsel %vm33, %v24, 0
    %37 = vmatpush.bf16.msra.mxu0 0
    %38 = vmatpush.bf16.msra.mxu0 0
    %39 = vmatpush.bf16.msra.mxu0 0
    %40 = vmatpush.bf16.msra.mxu0 0
    %41 = vmatpush.bf16.msra.mxu0 0
    %42 = vmatpush.bf16.msra.mxu0 0
    %43 = vmatpush.bf16.msra.mxu0 0
    %44 = vmatpush.bf16.msra.mxu0 %v35
    %45 = vmatmul.bf16.gmra.mxu0 %v31
    %v46 = vpop.f32.mrf.mxu0
    %v47 = vadd.f32 %v27, %v46
    %v48 = vpop.f32.mrf.mxu0
    %49 = vdwg.mxu0
    %v50 = vmax.f32 %v47, 0.0
    %v51 = vpack.c.bf16 %v50, %v50
    %v52 = vld [vmem:[%s3] sm:$0xf]
    %v53 = vld [vmem:[%s3 + $0x4] sm:$0xf]
    %v54 = vld [vmem:[%s3 + $0x8] sm:$0xf]
    %v55 = vld [vmem:[%s3 + $0xc] sm:$0xf]
    %v56 = vld [vmem:[%s3 + $0x10] sm:$0xf]
    %v57 = vld [vmem:[%s3 + $0x14] sm:$0xf]
    %v58 = vld [vmem:[%s3 + $0x18] sm:$0xf]
    %v59 = vld [vmem:[%s3 + $0x1c] sm:$0xf]
    %v60 = vld [vmem:[%s3 + $0x20] sm:$0xf]
    %v61 = vld [vmem:[%s3 + $0x24] sm:$0xf]
    %v62 = vld [vmem:[%s3 + $0x28] sm:$0xf]
    %v63 = vld [vmem:[%s3 + $0x2c] sm:$0xf]
    %v64 = vld [vmem:[%s3 + $0x30] sm:$0xf]
    %v65 = vld [vmem:[%s3 + $0x34] sm:$0xf]
    %v66 = vld [vmem:[%s3 + $0x38] sm:$0xf]
    %v67 = vld [vmem:[%s3 + $0x3c] sm:$0xf]
    %v68 = vld [vmem:[%s4] sm:$0x1]
    %v70 = vperm.slane %v68, 0
    %v88 = vunpack.c.l.b16 %v52
    %v89 = vunpack.c.l.b16 %v53
    %v90 = vunpack.c.l.b16 %v54
    %v91 = vunpack.c.l.b16 %v55
    %v92 = vunpack.c.l.b16 %v56
    %v93 = vunpack.c.l.b16 %v57
    %v94 = vunpack.c.l.b16 %v58
    %v95 = vunpack.c.l.b16 %v59
    %v96 = vunpack.c.l.b16 %v60
    %v97 = vunpack.c.l.b16 %v61
    %v98 = vunpack.c.l.b16 %v62
    %v99 = vunpack.c.l.b16 %v63
    %v100 = vunpack.c.l.b16 %v64
    %v101 = vunpack.c.l.b16 %v65
    %v102 = vunpack.c.l.b16 %v66
    %v103 = vunpack.c.l.b16 %v67
    %v104 = vpack.c.b16 %v89, %v88
    %v105 = vpack.c.b16 %v91, %v90
    %v106 = vpack.c.b16 %v93, %v92
    %v107 = vpack.c.b16 %v95, %v94
    %v108 = vpack.c.b16 %v97, %v96
    %v109 = vpack.c.b16 %v99, %v98
    %v110 = vpack.c.b16 %v101, %v100
    %v111 = vpack.c.b16 %v103, %v102
    %120 = vmatpush.bf16.msra.mxu0 %v111
    %121 = vmatpush.bf16.msra.mxu0 %v110
    %122 = vmatpush.bf16.msra.mxu0 %v109
    %123 = vmatpush.bf16.msra.mxu0 %v108
    %124 = vmatpush.bf16.msra.mxu0 %v107
    %125 = vmatpush.bf16.msra.mxu0 %v106
    %126 = vmatpush.bf16.msra.mxu0 %v105
    %127 = vmatpush.bf16.msra.mxu0 %v104
    %128 = vmatmul.bf16.gmra.mxu0 %v51
    %v129 = vpop.f32.mrf.mxu0
    %v130 = vadd.f32 %v70, %v129
    %v131 = vpop.f32.mrf.mxu0
    %132 = vdwg.mxu0
    %vm133 = vcmask 9216
    %134 = vst.msk [vmem:[#allocation2] sm:$0x3] %vm133, %v130
    // Predicated region
    $region22: #{net_forward.1} parent=1 // pred_check
      _
    $region23: #{net_forward.1} parent=1 // pred_check_branch
      %136 = sbr.rel (0) target = $region25
    $region24: #{net_forward.1} parent=1 // pred_region
      %138 = vsyncadd [#allocation3], 0
      %s140 = sshll.u32 [#allocation2], 4
      %s141 = int_to_ptr.vmem [resolvable:$true] %s140
      %s142 = sshll.u32 %s5, 4
      %s143 = int_to_ptr.hbm [resolvable:$true] %s142
      %145 = dma.vmem_to_hbm [thread:$0]  %s141, 32, %s143, [#allocation3]
    $region25: #{net_forward.1} parent=1 // pred_fallthru
      _
    // Predicated region
    $region26: #{net_forward.1} parent=1 // pred_check
      _
    $region27: #{net_forward.1} parent=1 // pred_check_branch
      %147 = sbr.rel (0) target = $region29
    $region28: #{net_forward.1} parent=1 // pred_region
      %149 = dma.done [#allocation3], 32
    $region29: #{net_forward.1} parent=1 // pred_fallthru
      _
    %150 = vsyncpa [#allocation3], 1

</llo_original>
